<compile_context>
chip_gen: v7x
topology: tpu7x:2x2x1
jax: 0.10.0
libtpu: 0.0.40
codegen_flags: <defaults>
</compile_context>

<pallas_src>
import functools

import jax
import jax.numpy as jnp
from jax import lax
from jax.experimental import pallas as pl
from jax.experimental.pallas import tpu as pltpu


def _transe_kernel(h_ref, r_ref, t_ref, out_ref):
    """h/r/t refs: (D_pad, TB) tiles (dim on sublanes, batch on lanes).

    out ref: (1, TB) lane-dense block of per-triple scores.
    """
    eps = 1e-12  # matches torch.nn.functional.normalize default eps

    h = h_ref[...].astype(jnp.float32)
    r = r_ref[...].astype(jnp.float32)
    t = t_ref[...].astype(jnp.float32)

    def l2_normalize(x):
        # x / max(||x||, eps) == x * rsqrt(max(||x||^2, eps^2))
        s = jnp.sum(x * x, axis=0, keepdims=True)          # (1, TB)
        return x * lax.rsqrt(jnp.maximum(s, eps * eps))    # sublane broadcast

    d = l2_normalize(h) + l2_normalize(r) - l2_normalize(t)   # (D_pad, TB)
    # Per-triple L2 norm -> naturally lane-dense (1, TB), stored unmasked.
    out_ref[...] = jnp.sqrt(jnp.sum(d * d, axis=0, keepdims=True))


@functools.partial(jax.jit, static_argnames=("tile_b",))
def transe_forward(entity_emb, relation_emb, heads, relations, tails,
                   *, tile_b=256):
    """Pallas TransE forward.

    entity_emb:   (E, D) float32 (or bfloat16)
    relation_emb: (R, D) float32 (or bfloat16)
    heads/relations/tails: (B,) int32
    returns: (B,) float32 scores
    """
    B = heads.shape[0]
    D = entity_emb.shape[1]

    # ---- wrapper-side gather: coarse contiguous (B, D) slabs for the kernel.
    h = jnp.take(entity_emb, heads, axis=0)
    r = jnp.take(relation_emb, relations, axis=0)
    t = jnp.take(entity_emb, tails, axis=0)

    # ---- pad + transpose to (D_pad, B_pad): dim -> sublanes (x8),
    #      batch -> lanes (x tile_b, tile_b a multiple of 128).
    TB = tile_b
    B_pad = pl.cdiv(B, TB) * TB
    D_pad = pl.cdiv(D, 8) * 8

    def prep(x):
        x = jnp.pad(x, ((0, B_pad - B), (0, D_pad - D)))
        return x.T  # (D_pad, B_pad)

    hT, rT, tT = prep(h), prep(r), prep(t)

    num_blocks = B_pad // TB
    in_spec = pl.BlockSpec((D_pad, TB), lambda i: (0, i))

    out = pl.pallas_call(
        _transe_kernel,
        out_shape=jax.ShapeDtypeStruct((1, B_pad), jnp.float32),
        grid_spec=pltpu.PrefetchScalarGridSpec(
            num_scalar_prefetch=0,
            grid=(num_blocks,),
            in_specs=[in_spec, in_spec, in_spec],
            out_specs=pl.BlockSpec((1, TB), lambda i: (0, i)),
        ),
        compiler_params=pltpu.CompilerParams(
            dimension_semantics=("parallel",)),
    )(hT, rT, tT)

    return out[0, :B]


def transe_reference(entity_emb, relation_emb, heads, relations, tails):
    """Pure-JAX reference mirroring the PyTorch forward."""
    eps = 1e-12
    h = entity_emb[heads].astype(jnp.float32)
    r = relation_emb[relations].astype(jnp.float32)
    t = entity_emb[tails].astype(jnp.float32)

    def norm(x):
        n = jnp.linalg.norm(x, axis=1, keepdims=True)
        return x / jnp.maximum(n, eps)

    h, r, t = norm(h), norm(r), norm(t)
    return jnp.linalg.norm(h + r - t, axis=1)


def xavier_uniform(key, shape):
    fan_in, fan_out = shape
    a = jnp.sqrt(6.0 / (fan_in + fan_out))
    return jax.random.uniform(key, shape, jnp.float32, minval=-a, maxval=a)


if __name__ == "__main__":
    num_entities = 16
    num_relations = 4
    embedding_dim = 32
    batch = 8

    key = jax.random.PRNGKey(0)
    k_ent, k_rel, k_h, k_r, k_t = jax.random.split(key, 5)

    # deterministic xavier-uniform init (as in the module __init__)
    entity_emb = xavier_uniform(k_ent, (num_entities, embedding_dim))
    relation_emb = xavier_uniform(k_rel, (num_relations, embedding_dim))

    heads = jax.random.randint(k_h, (batch,), 0, num_entities, dtype=jnp.int32)
    relations = jax.random.randint(k_r, (batch,), 0, num_relations, dtype=jnp.int32)
    tails = jax.random.randint(k_t, (batch,), 0, num_entities, dtype=jnp.int32)

    score = transe_forward(entity_emb, relation_emb, heads, relations, tails)
    score = jax.block_until_ready(score)

    ref = transe_reference(entity_emb, relation_emb, heads, relations, tails)
    assert score.shape == (batch,)
    assert jnp.allclose(score, ref, atol=1e-5, rtol=1e-5), (score, ref)

    print("KERNEL_OK")
</pallas_src>

<mosaic_0001>
module attributes {stable_mosaic.version = 11 : i64} {
  func.func @_transe_kernel(%arg0: i32, %arg1: memref<32x256xf32, #tpu.memory_space<vmem>>, %arg2: memref<32x256xf32, #tpu.memory_space<vmem>>, %arg3: memref<32x256xf32, #tpu.memory_space<vmem>>, %arg4: memref<1x256xf32, #tpu.memory_space<vmem>>) attributes {dimension_semantics = [#tpu.dimension_semantics<parallel>], iteration_bounds = array<i64: 1>, scalar_prefetch = 0 : i64, scratch_operands = 0 : i64, tpu.core_type = #tpu.core_type<tc>, window_params = [{transform_indices = @transform_0, window_bounds = array<i64: 32, 256>}, {transform_indices = @transform_1, window_bounds = array<i64: 32, 256>}, {transform_indices = @transform_2, window_bounds = array<i64: 32, 256>}, {transform_indices = @transform_3, window_bounds = array<i64: 1, 256>}]} {
    %c0 = arith.constant 0 : index
    %c0_0 = arith.constant 0 : index
    %0 = vector.load %arg1[%c0, %c0_0] : memref<32x256xf32, #tpu.memory_space<vmem>>, vector<32x256xf32>
    %c0_1 = arith.constant 0 : index
    %c0_2 = arith.constant 0 : index
    %1 = vector.load %arg2[%c0_1, %c0_2] : memref<32x256xf32, #tpu.memory_space<vmem>>, vector<32x256xf32>
    %c0_3 = arith.constant 0 : index
    %c0_4 = arith.constant 0 : index
    %2 = vector.load %arg3[%c0_3, %c0_4] : memref<32x256xf32, #tpu.memory_space<vmem>>, vector<32x256xf32>
    %3 = arith.mulf %0, %0 : vector<32x256xf32>
    %cst = arith.constant dense<0.000000e+00> : vector<256xf32>
    %4 = vector.multi_reduction <add>, %3, %cst [0] : vector<32x256xf32> to vector<256xf32>
    %5 = vector.shape_cast %4 : vector<256xf32> to vector<1x256xf32>
    %cst_5 = arith.constant 1.000000e-24 : f32
    %6 = vector.broadcast %cst_5 : f32 to vector<1x256xf32>
    %7 = arith.maximumf %5, %6 : vector<1x256xf32>
    %8 = math.rsqrt %7 : vector<1x256xf32>
    %9 = vector.broadcast %8 : vector<1x256xf32> to vector<32x256xf32>
    %10 = arith.mulf %0, %9 : vector<32x256xf32>
    %11 = arith.mulf %1, %1 : vector<32x256xf32>
    %cst_6 = arith.constant dense<0.000000e+00> : vector<256xf32>
    %12 = vector.multi_reduction <add>, %11, %cst_6 [0] : vector<32x256xf32> to vector<256xf32>
    %13 = vector.shape_cast %12 : vector<256xf32> to vector<1x256xf32>
    %cst_7 = arith.constant 1.000000e-24 : f32
    %14 = vector.broadcast %cst_7 : f32 to vector<1x256xf32>
    %15 = arith.maximumf %13, %14 : vector<1x256xf32>
    %16 = math.rsqrt %15 : vector<1x256xf32>
    %17 = vector.broadcast %16 : vector<1x256xf32> to vector<32x256xf32>
    %18 = arith.mulf %1, %17 : vector<32x256xf32>
    %19 = arith.addf %10, %18 : vector<32x256xf32>
    %20 = arith.mulf %2, %2 : vector<32x256xf32>
    %cst_8 = arith.constant dense<0.000000e+00> : vector<256xf32>
    %21 = vector.multi_reduction <add>, %20, %cst_8 [0] : vector<32x256xf32> to vector<256xf32>
    %22 = vector.shape_cast %21 : vector<256xf32> to vector<1x256xf32>
    %cst_9 = arith.constant 1.000000e-24 : f32
    %23 = vector.broadcast %cst_9 : f32 to vector<1x256xf32>
    %24 = arith.maximumf %22, %23 : vector<1x256xf32>
    %25 = math.rsqrt %24 : vector<1x256xf32>
    %26 = vector.broadcast %25 : vector<1x256xf32> to vector<32x256xf32>
    %27 = arith.mulf %2, %26 : vector<32x256xf32>
    %28 = arith.subf %19, %27 : vector<32x256xf32>
    %29 = arith.mulf %28, %28 : vector<32x256xf32>
    %cst_10 = arith.constant dense<0.000000e+00> : vector<256xf32>
    %30 = vector.multi_reduction <add>, %29, %cst_10 [0] : vector<32x256xf32> to vector<256xf32>
    %31 = vector.shape_cast %30 : vector<256xf32> to vector<1x256xf32>
    %32 = math.sqrt %31 : vector<1x256xf32>
    %c0_11 = arith.constant 0 : index
    %c0_12 = arith.constant 0 : index
    %33 = vector.load %arg4[%c0_11, %c0_12] : memref<1x256xf32, #tpu.memory_space<vmem>>, vector<1x256xf32>
    tpu.vector_store %arg4[%c0_11, %c0_12], %32 {strides = array<i32>} : memref<1x256xf32, #tpu.memory_space<vmem>>, vector<1x256xf32>,
    return
  }
  func.func @transform_0(%arg0: i32) -> (i32, i32) {
    %c0_i32 = arith.constant 0 : i32
    %c0_i32_0 = arith.constant 0 : i32
    return %c0_i32, %arg0 : i32, i32
  }
  func.func @transform_1(%arg0: i32) -> (i32, i32) {
    %c0_i32 = arith.constant 0 : i32
    %c0_i32_0 = arith.constant 0 : i32
    return %c0_i32, %arg0 : i32, i32
  }
  func.func @transform_2(%arg0: i32) -> (i32, i32) {
    %c0_i32 = arith.constant 0 : i32
    %c0_i32_0 = arith.constant 0 : i32
    return %c0_i32, %arg0 : i32, i32
  }
  func.func @transform_3(%arg0: i32) -> (i32, i32) {
    %c0_i32 = arith.constant 0 : i32
    %c0_i32_0 = arith.constant 0 : i32
    return %c0_i32, %arg0 : i32, i32
  }
}

</mosaic_0001>

<llo_original>
// kernel: transe_forward.1
$region0: #{transe_forward.1}
  #allocation0 [shape = 'u32[]', space=smem, size = 0x4, offset = 0x4, fixed_abs, tag = 'smem constant byte address 0x4 - core index']
  #allocation1 [shape = 'u32[144,128]{1,0:T(1,128)}', space=vmem, size = 0x12000, scoped, tag = 'internal scratch']
  %s0 = inlined_call_operand.vmem [shape: f32[32,256], index: 0, kind: input, shape index: {}]
  %s1 = inlined_call_operand.vmem [shape: f32[32,256], index: 1, kind: input, shape index: {}]
  %s2 = inlined_call_operand.vmem [shape: f32[32,256], index: 2, kind: input, shape index: {}]
  %s3 = inlined_call_operand.vmem [shape: f32[1,256], index: 3, kind: output, shape index: {}]
  %s4 = sld [smem:[#allocation0]]
  $region22: #{transe_forward.1} parent=0
    _
  %s6 = ssub.s32 1, %s4
  %s7 = scalar_select 0, %s6, %s4
  // Predicated region
  $region2: #{transe_forward.1} parent=0 // pred_check
    _
  $region3: #{transe_forward.1} parent=0 // pred_check_branch
    %9 = sbr.rel (0) target = $region5
  $region4: #{transe_forward.1} parent=0 // pred_region
    _
  $region5: #{transe_forward.1} parent=0 // pred_fallthru
    _
  // Predicated region
  $region6: #{transe_forward.1} parent=0 // pred_check
    _
  $region7: #{transe_forward.1} parent=0 // pred_check_branch
    %11 = sbr.rel (0) target = $region9
  $region8: #{transe_forward.1} parent=0 // pred_region
    _
  $region9: #{transe_forward.1} parent=0 // pred_fallthru
    _
  // Predicated region
  $region10: #{transe_forward.1} parent=0 // pred_check
    _
  $region11: #{transe_forward.1} parent=0 // pred_check_branch
    %13 = sbr.rel (0) target = $region13
  $region12: #{transe_forward.1} parent=0 // pred_region
    _
  $region13: #{transe_forward.1} parent=0 // pred_fallthru
    _
  %v14 = vld [vmem:[%s0] sm:$0xff]
  %v15 = vld [vmem:[%s0 + $0x8] sm:$0xff]
  %v16 = vld [vmem:[%s0 + $0x10] sm:$0xff]
  %v17 = vld [vmem:[%s0 + $0x18] sm:$0xff]
  %v18 = vld [vmem:[%s0 + $0x20] sm:$0xff]
  %v19 = vld [vmem:[%s0 + $0x28] sm:$0xff]
  %v20 = vld [vmem:[%s0 + $0x30] sm:$0xff]
  %v21 = vld [vmem:[%s0 + $0x38] sm:$0xff]
  %v22 = vld [vmem:[%s1] sm:$0xff]
  %v23 = vld [vmem:[%s1 + $0x8] sm:$0xff]
  %v24 = vld [vmem:[%s1 + $0x10] sm:$0xff]
  %v25 = vld [vmem:[%s1 + $0x18] sm:$0xff]
  %v26 = vld [vmem:[%s1 + $0x20] sm:$0xff]
  %v27 = vld [vmem:[%s1 + $0x28] sm:$0xff]
  %v28 = vld [vmem:[%s1 + $0x30] sm:$0xff]
  %v29 = vld [vmem:[%s1 + $0x38] sm:$0xff]
  %v30 = vld [vmem:[%s2] sm:$0xff]
  %v31 = vld [vmem:[%s2 + $0x8] sm:$0xff]
  %v32 = vld [vmem:[%s2 + $0x10] sm:$0xff]
  %v33 = vld [vmem:[%s2 + $0x18] sm:$0xff]
  %v34 = vld [vmem:[%s2 + $0x20] sm:$0xff]
  %v35 = vld [vmem:[%s2 + $0x28] sm:$0xff]
  %v36 = vld [vmem:[%s2 + $0x30] sm:$0xff]
  %v37 = vld [vmem:[%s2 + $0x38] sm:$0xff]
  %v38 = vmul.f32 %v14, %v14
  %v39 = vmul.f32 %v15, %v15
  %v40 = vmul.f32 %v16, %v16
  %v41 = vmul.f32 %v17, %v17
  %v42 = vmul.f32 %v18, %v18
  %v43 = vmul.f32 %v19, %v19
  %v44 = vmul.f32 %v20, %v20
  %v45 = vmul.f32 %v21, %v21
  %v46 = vadd.f32 %v38, %v40
  %v47 = vadd.f32 %v46, %v42
  %v48 = vadd.f32 %v47, %v44
  %v49 = vrot.slane %v48, 4
  %v50 = vadd.f32 %v48, %v49
  %v51 = vrot.slane %v50, 2
  %v52 = vadd.f32 %v50, %v51
  %v53 = vrot.slane %v52, 1
  %v54 = vadd.f32 %v52, %v53
  %v55 = vadd.f32 %v39, %v41
  %v56 = vadd.f32 %v55, %v43
  %v57 = vadd.f32 %v56, %v45
  %v58 = vrot.slane %v57, 4
  %v59 = vadd.f32 %v57, %v58
  %v60 = vrot.slane %v59, 2
  %v61 = vadd.f32 %v59, %v60
  %v62 = vrot.slane %v61, 1
  %v63 = vadd.f32 %v61, %v62
  %v64 = vmax.f32 %v54, 1e-24
  %v65 = vmax.f32 %v63, 1e-24
  %v66 = vrsqrt.pop %v64
  %v67 = vrsqrt.pop %v65
  %v68 = vmul.f32 %v14, %v66
  %v69 = vmul.f32 %v15, %v67
  %v70 = vmul.f32 %v16, %v66
  %v71 = vmul.f32 %v17, %v67
  %v72 = vmul.f32 %v18, %v66
  %v73 = vmul.f32 %v19, %v67
  %v74 = vmul.f32 %v20, %v66
  %v75 = vmul.f32 %v21, %v67
  %v76 = vmul.f32 %v22, %v22
  %v77 = vmul.f32 %v23, %v23
  %v78 = vmul.f32 %v24, %v24
  %v79 = vmul.f32 %v25, %v25
  %v80 = vmul.f32 %v26, %v26
  %v81 = vmul.f32 %v27, %v27
  %v82 = vmul.f32 %v28, %v28
  %v83 = vmul.f32 %v29, %v29
  %v84 = vadd.f32 %v76, %v78
  %v85 = vadd.f32 %v84, %v80
  %v86 = vadd.f32 %v85, %v82
  %v87 = vrot.slane %v86, 4
  %v88 = vadd.f32 %v86, %v87
  %v89 = vrot.slane %v88, 2
  %v90 = vadd.f32 %v88, %v89
  %v91 = vrot.slane %v90, 1
  %v92 = vadd.f32 %v90, %v91
  %v93 = vadd.f32 %v77, %v79
  %v94 = vadd.f32 %v93, %v81
  %v95 = vadd.f32 %v94, %v83
  %v96 = vrot.slane %v95, 4
  %v97 = vadd.f32 %v95, %v96
  %v98 = vrot.slane %v97, 2
  %v99 = vadd.f32 %v97, %v98
  %v100 = vrot.slane %v99, 1
  %v101 = vadd.f32 %v99, %v100
  %v102 = vmax.f32 %v92, 1e-24
  %v103 = vmax.f32 %v101, 1e-24
  %v104 = vrsqrt.pop %v102
  %v105 = vrsqrt.pop %v103
  %v106 = vmul.f32 %v22, %v104
  %v107 = vmul.f32 %v23, %v105
  %v108 = vmul.f32 %v24, %v104
  %v109 = vmul.f32 %v25, %v105
  %v110 = vmul.f32 %v26, %v104
  %v111 = vmul.f32 %v27, %v105
  %v112 = vmul.f32 %v28, %v104
  %v113 = vmul.f32 %v29, %v105
  %v114 = vadd.f32 %v68, %v106
  %v115 = vadd.f32 %v69, %v107
  %v116 = vadd.f32 %v70, %v108
  %v117 = vadd.f32 %v71, %v109
  %v118 = vadd.f32 %v72, %v110
  %v119 = vadd.f32 %v73, %v111
  %v120 = vadd.f32 %v74, %v112
  %v121 = vadd.f32 %v75, %v113
  %v122 = vmul.f32 %v30, %v30
  %v123 = vmul.f32 %v31, %v31
  %v124 = vmul.f32 %v32, %v32
  %v125 = vmul.f32 %v33, %v33
  %v126 = vmul.f32 %v34, %v34
  %v127 = vmul.f32 %v35, %v35
  %v128 = vmul.f32 %v36, %v36
  %v129 = vmul.f32 %v37, %v37
  %v130 = vadd.f32 %v122, %v124
  %v131 = vadd.f32 %v130, %v126
  %v132 = vadd.f32 %v131, %v128
  %v133 = vrot.slane %v132, 4
  %v134 = vadd.f32 %v132, %v133
  %v135 = vrot.slane %v134, 2
  %v136 = vadd.f32 %v134, %v135
  %v137 = vrot.slane %v136, 1
  %v138 = vadd.f32 %v136, %v137
  %v139 = vadd.f32 %v123, %v125
  %v140 = vadd.f32 %v139, %v127
  %v141 = vadd.f32 %v140, %v129
  %v142 = vrot.slane %v141, 4
  %v143 = vadd.f32 %v141, %v142
  %v144 = vrot.slane %v143, 2
  %v145 = vadd.f32 %v143, %v144
  %v146 = vrot.slane %v145, 1
  %v147 = vadd.f32 %v145, %v146
  %v148 = vmax.f32 %v138, 1e-24
  %v149 = vmax.f32 %v147, 1e-24
  %v150 = vrsqrt.pop %v148
  %v151 = vrsqrt.pop %v149
  %v152 = vmul.f32 %v30, %v150
  %v153 = vmul.f32 %v31, %v151
  %v154 = vmul.f32 %v32, %v150
  %v155 = vmul.f32 %v33, %v151
  %v156 = vmul.f32 %v34, %v150
  %v157 = vmul.f32 %v35, %v151
  %v158 = vmul.f32 %v36, %v150
  %v159 = vmul.f32 %v37, %v151
  %v160 = vsub.f32 %v114, %v152
  %v161 = vsub.f32 %v115, %v153
  %v162 = vsub.f32 %v116, %v154
  %v163 = vsub.f32 %v117, %v155
  %v164 = vsub.f32 %v118, %v156
  %v165 = vsub.f32 %v119, %v157
  %v166 = vsub.f32 %v120, %v158
  %v167 = vsub.f32 %v121, %v159
  %v168 = vmul.f32 %v160, %v160
  %v169 = vmul.f32 %v161, %v161
  %v170 = vmul.f32 %v162, %v162
  %v171 = vmul.f32 %v163, %v163
  %v172 = vmul.f32 %v164, %v164
  %v173 = vmul.f32 %v165, %v165
  %v174 = vmul.f32 %v166, %v166
  %v175 = vmul.f32 %v167, %v167
  %v176 = vadd.f32 %v168, %v170
  %v177 = vadd.f32 %v176, %v172
  %v178 = vadd.f32 %v177, %v174
  %v179 = vrot.slane %v178, 4
  %v180 = vadd.f32 %v178, %v179
  %v181 = vrot.slane %v180, 2
  %v182 = vadd.f32 %v180, %v181
  %v183 = vrot.slane %v182, 1
  %v184 = vadd.f32 %v182, %v183
  %v185 = vadd.f32 %v169, %v171
  %v186 = vadd.f32 %v185, %v173
  %v187 = vadd.f32 %v186, %v175
  %v188 = vrot.slane %v187, 4
  %v189 = vadd.f32 %v187, %v188
  %v190 = vrot.slane %v189, 2
  %v191 = vadd.f32 %v189, %v190
  %v192 = vrot.slane %v191, 1
  %v193 = vadd.f32 %v191, %v192
  %v194 = vrsqrt.pop %v184
  %v195 = vmul.f32 %v184, %v194
  %vm196 = vcmp.eq.f32.partialorder %v184, inf
  %v197 = vsel %vm196, %v184, %v195
  %vm198 = vcmp.eq.f32.partialorder %v184, 0.0
  %v199 = vand.u32 %v184, 2147483648
  %v200 = vsel %vm198, %v199, %v197
  %v201 = vrsqrt.pop %v193
  %v202 = vmul.f32 %v193, %v201
  %vm203 = vcmp.eq.f32.partialorder %v193, inf
  %v204 = vsel %vm203, %v193, %v202
  %vm205 = vcmp.eq.f32.partialorder %v193, 0.0
  %v206 = vand.u32 %v193, 2147483648
  %v207 = vsel %vm205, %v206, %v204
  %v210 = vcombine.low %v200, %v207
  %v212 = vunpack.c.l.s4 1966171168
  %v213 = vunpack.c.0.s8 %v212
  %v214 = vlaneseq
  %v215 = vshrl.u32 %v214, 7
  %v216 = vsub.s32 %v213, %v215
  %v217 = vrot.slane %v210, %v216
  %v219 = vunpack.c.l.s4 1966171168
  %v220 = vunpack.c.0.s8 %v219
  %v221 = vlaneseq
  %v222 = vshrl.u32 %v221, 7
  %v223 = vsub.s32 %v220, %v222
  %v224 = vrot.slane %v217, %v223
  %v226 = vlaneseq
  %vm227 = vcmp.ge.s32.totalorder %v226, 0
  %vm228 = vcmp.lt.s32.totalorder %v226, 256
  %vm229 = vmand %vm227, %vm228
  %230 = vst.msk [vmem:[%s3] sm:$0x3] %vm229, %v224
  // Predicated region
  $region14: #{transe_forward.1} parent=0 // pred_check
    _
  $region15: #{transe_forward.1} parent=0 // pred_check_branch
    %232 = sbr.rel (0) target = $region17
  $region16: #{transe_forward.1} parent=0 // pred_region
    _
  $region17: #{transe_forward.1} parent=0 // pred_fallthru
    _
  // Predicated region
  $region18: #{transe_forward.1} parent=0 // pred_check
    _
  $region19: #{transe_forward.1} parent=0 // pred_check_branch
    %234 = sbr.rel (0) target = $region21
  $region20: #{transe_forward.1} parent=0 // pred_region
    _
  $region21: #{transe_forward.1} parent=0 // pred_fallthru
    _

</llo_original>
